<compile_context>
chip_gen: v6e
topology: v6e:2x2x1
jax: 0.10.0
libtpu: 0.0.40
codegen_flags: <defaults>
</compile_context>

<pallas_src>
import numpy as np
import jax
import jax.numpy as jnp
from jax.experimental import pallas as pl
from jax.experimental.pallas import tpu as pltpu


_LANE = 128
_SUBLANE = 8
_SINGLE_BUFFER_BYTES = 4 << 20     # single-buffer resident blocks above this


def _round_up(n, m):
    return ((n + m - 1) // m) * m


def _pick_row_tile(B):
    """Row (M) tile: >=2 parallel tiles when B allows (v7x megacore), bounded
    padding waste, 256-multiples preferred at large B (v6e/v7x MXU)."""
    if B <= 16:
        return _round_up(B, _SUBLANE)
    if B <= 512:
        # two parallel row tiles, waste <= 2*(sublane-1) rows (e.g. B=264 -> 272)
        return _round_up(-(-B // 2), _SUBLANE)
    waste256 = (-B) % 256
    waste128 = (-B) % 128
    return 128 if (waste128 + 64) < waste256 else 256


def _pick_col_tile(Hp):
    return Hp if Hp <= 512 else 512        # 256-multiple keeps the MXU full


def _pick_k_tile(Kp):
    return Kp if Kp <= 2048 else 512


def _weight_spec(block_shape, index_map, nbytes):
    """BlockSpec for a weight/bias operand resident across the inner (row) grid
    axis.  Above a few MiB, request a single buffer so the dominant VMEM
    allocation is not doubled (critical on v7x's 64 MiB / v5e's 16 MiB scoped
    VMEM); tiny blocks keep the default 2-deep pipeline."""
    if nbytes >= _SINGLE_BUFFER_BYTES:
        return pl.BlockSpec(block_shape, index_map, pipeline_mode=pl.Buffered(1))
    return pl.BlockSpec(block_shape, index_map)


def _vmem_limit(block_bytes):
    est = sum(2 * b for b in block_bytes) + (4 << 20)
    return int(min(100 << 20, max(16 << 20, est)))


# ----------------------------- kernels --------------------------------------

def _fused_kernel(x_ref, w_ref, b_ref, o_ref, acc_ref):
    """o = leaky_relu(x @ W_fused + b_fused), K-tiled with f32 accumulator.

    x: (TB, TK) bf16   w: (TK, TN) bf16   b: (1, TN) f32
    acc: (TB, TN) f32 scratch             o: (TB, TN) bf16
    """
    k = pl.program_id(2)

    @pl.when(k == 0)
    def _():
        acc_ref[...] = jnp.zeros_like(acc_ref)

    acc_ref[...] += jnp.dot(x_ref[...], w_ref[...],
                            preferred_element_type=jnp.float32)

    @pl.when(k == pl.num_programs(2) - 1)
    def _():
        z = acc_ref[...] + b_ref[...]
        o_ref[...] = jnp.maximum(z, 0.1 * z).astype(o_ref.dtype)


def _unfused_kernel(x_ref, wc_ref, bc_ref, wl_ref, bl_ref, o_ref):
    """Two chained matmuls (used when H >> C, where fusing would inflate FLOPs).

    x: (TB, Kp) bf16  wc: (Kp, Cp) bf16  bc: (1, Cp) f32
    wl: (Cp, TN) bf16 bl: (1, TN) f32    o: (TB, TN) bf16
    """
    y = jnp.dot(x_ref[...], wc_ref[...], preferred_element_type=jnp.float32)
    y = y + bc_ref[...]
    z = jnp.dot(y.astype(wl_ref.dtype), wl_ref[...],
                preferred_element_type=jnp.float32)
    z = z + bl_ref[...]
    o_ref[...] = jnp.maximum(z, 0.1 * z).astype(o_ref.dtype)


# --------------------------- parameter prep ---------------------------------

def prepare_encoder_params(params, act_dtype=jnp.bfloat16):
    """One-time parameter prep (hoisted out of the per-forward path):
    fusion-policy decision, conv+linear fusion (when profitable), zero-padding
    to lane/sublane-dense shapes, and bf16 casts."""
    emb, wc, bc, wl, bl = (params[k] for k in ("emb", "wc", "bc", "wl", "bl"))
    W, C, _ = wc.shape
    H = wl.shape[1]
    dim = emb.shape[1]
    K = W * C
    Kp = _round_up(K, _LANE)
    Cp = _round_up(C, _LANE)
    Hp = _round_up(H, _LANE)

    # Fuse conv taps + linear only when it does not inflate FLOPs/bytes:
    #   fused  = 2*W*C*H per row,  unfused = 2*C*(W*C + H)  =>  fuse iff
    #   H*(W-1) <= W*C.
    fuse = H * (W - 1) <= W * C

    prepared = {
        "meta": dict(W=W, C=C, H=H, K=K, dim=dim, Kp=Kp, Cp=Cp, Hp=Hp,
                     fused=fuse),
        "emb": emb.astype(act_dtype),   # bf16 table; gather stays in XLA
    }

    if fuse:
        # Quantize each factor before composing ("fuse after casting") so the
        # fused operator carries the same per-factor bf16 rounding as the
        # unfused path, not a quantization of the composed matrix.
        wc_q = wc.astype(act_dtype).astype(jnp.float32)
        wl_q = wl.astype(act_dtype).astype(jnp.float32)
        w_fused = wc_q.reshape(K, C) @ wl_q                     # (K, H)
        b_fused = bc.astype(jnp.float32) @ wl_q + bl.astype(jnp.float32)
        prepared["w"] = (jnp.zeros((Kp, Hp), act_dtype)
                         .at[:K, :H].set(w_fused.astype(act_dtype)))
        prepared["b"] = (jnp.zeros((1, Hp), jnp.float32)
                         .at[:, :H].set(b_fused))
    else:
        prepared["wc"] = (jnp.zeros((Kp, Cp), act_dtype)
                          .at[:K, :C].set(wc.reshape(K, C).astype(act_dtype)))
        prepared["bc"] = (jnp.zeros((1, Cp), jnp.float32)
                          .at[:, :C].set(bc.astype(jnp.float32)))
        prepared["wl"] = (jnp.zeros((Cp, Hp), act_dtype)
                          .at[:C, :H].set(wl.astype(act_dtype)))
        prepared["bl"] = (jnp.zeros((1, Hp), jnp.float32)
                          .at[:, :H].set(bl.astype(jnp.float32)))
    return prepared


# ------------------------------ forward -------------------------------------

def encoder_forward(feat_matrix, pos_to_predict, source_padding, prepared):
    meta = prepared["meta"]
    W, C, H, K = meta["W"], meta["C"], meta["H"], meta["K"]
    Kp, Cp, Hp = meta["Kp"], meta["Cp"], meta["Hp"]
    emb_q = prepared["emb"]
    act_dtype = emb_q.dtype
    B, L, G = feat_matrix.shape
    p = W // 2

    # ---- FeatEmbedding + window gather: only the W rows around pos ----------
    # keep[b, w] folds the conv 'same' boundary zeros, the FeatEmbedding
    # padding mask, and the masked-position zeroing (center tap); indices are
    # clamped so an out-of-range pos cannot read OOB.
    pos = pos_to_predict.astype(jnp.int32)
    offs = jnp.arange(W, dtype=jnp.int32) - p                    # (-p .. p)
    idx = pos[:, None] + offs[None, :]                           # (B, W)
    in_bounds = (idx >= 0) & (idx < L)
    idx_c = jnp.clip(idx, 0, L - 1)
    padded = jnp.take_along_axis(source_padding, idx_c, axis=1)  # (B, W)
    keep = in_bounds & jnp.logical_not(padded) & (idx != pos[:, None])
    fm_win = jnp.take_along_axis(feat_matrix, idx_c[:, :, None], axis=1)  # (B,W,G)
    x_win = emb_q[fm_win]                                        # (B, W, G, dim) bf16
    x_win = x_win * keep[:, :, None, None].astype(act_dtype)
    x_cat = x_win.reshape(B, K)                                  # (B, K) bf16

    # ---- lane/sublane-dense activation buffer -------------------------------
    TB = _pick_row_tile(B)
    Bp = _round_up(B, TB)
    x_p = jnp.zeros((Bp, Kp), act_dtype).at[:B, :K].set(x_cat)

    TN = _pick_col_tile(Hp)
    n_i = Bp // TB
    n_j = Hp // TN
    out_shape = jax.ShapeDtypeStruct((Bp, Hp), act_dtype)        # bf16 output

    if meta["fused"]:
        w_p, b_p = prepared["w"], prepared["b"]
        TK = _pick_k_tile(Kp)
        n_k = Kp // TK
        blk_bytes = [TB * TK * 2, TK * TN * 2, TN * 4,
                     TB * TN * 2, TB * TN * 4]
        out = pl.pallas_call(
            _fused_kernel,
            out_shape=out_shape,
            grid=(n_j, n_i, n_k),                                # k innermost
            in_specs=[
                pl.BlockSpec((TB, TK), lambda j, i, k: (i, k)),
                _weight_spec((TK, TN), lambda j, i, k: (k, j), TK * TN * 2),
                _weight_spec((1, TN), lambda j, i, k: (0, j), TN * 4),
            ],
            out_specs=pl.BlockSpec((TB, TN), lambda j, i, k: (i, j)),
            scratch_shapes=[pltpu.VMEM((TB, TN), jnp.float32)],
            compiler_params=pltpu.CompilerParams(
                dimension_semantics=("parallel", "parallel", "arbitrary"),
                vmem_limit_bytes=_vmem_limit(blk_bytes)),
        )(x_p, w_p, b_p)
    else:
        wc_p, bc_p = prepared["wc"], prepared["bc"]
        wl_p, bl_p = prepared["wl"], prepared["bl"]
        blk_bytes = [TB * Kp * 2, Kp * Cp * 2, Cp * 4,
                     Cp * TN * 2, TN * 4, TB * TN * 2]
        out = pl.pallas_call(
            _unfused_kernel,
            out_shape=out_shape,
            grid=(n_j, n_i),                                     # rows innermost
            in_specs=[
                pl.BlockSpec((TB, Kp), lambda j, i: (i, 0)),
                _weight_spec((Kp, Cp), lambda j, i: (0, 0), Kp * Cp * 2),
                _weight_spec((1, Cp), lambda j, i: (0, 0), Cp * 4),
                _weight_spec((Cp, TN), lambda j, i: (0, j), Cp * TN * 2),
                _weight_spec((1, TN), lambda j, i: (0, j), TN * 4),
            ],
            out_specs=pl.BlockSpec((TB, TN), lambda j, i: (i, j)),
            compiler_params=pltpu.CompilerParams(
                dimension_semantics=("parallel", "parallel"),
                vmem_limit_bytes=_vmem_limit(blk_bytes)),
        )(x_p, wc_p, bc_p, wl_p, bl_p)

    return out[:B, :H]                                           # (B, H) bf16


# ------------------------------ reference -----------------------------------

def encoder_reference(feat_matrix, pos_to_predict, source_padding, params):
    """Pure-JAX f32 reference mirroring the PyTorch forward (full, unfused)."""
    emb, wc, bc, wl, bl = (params[k] for k in ("emb", "wc", "bc", "wl", "bl"))
    B, L, G = feat_matrix.shape
    C = G * emb.shape[1]
    W = wc.shape[0]
    p = W // 2
    feat_emb = emb[feat_matrix].reshape(B, L, C)
    valid = jnp.logical_not(source_padding)
    not_masked = jnp.arange(L)[None, :] != pos_to_predict[:, None]
    feat_emb = feat_emb * (valid & not_masked)[..., None].astype(feat_emb.dtype)
    x_pad = jnp.pad(feat_emb, ((0, 0), (p, p), (0, 0)))
    y = jnp.zeros((B, L, C), jnp.float32)
    for w in range(W):
        y = y + jnp.einsum("blc,cd->bld", x_pad[:, w:w + L, :], wc[w])
    y = y + bc[0]
    z = jnp.einsum("blc,ch->blh", y, wl) + bl[0]
    z = jnp.where(z >= 0, z, 0.1 * z)
    return z[jnp.arange(B), pos_to_predict]


# -------------------------------- test --------------------------------------

def _make_test_case(key, B, L, G, dim, H, W, num_features):
    C = G * dim
    k_emb, k_wc, k_bc, k_wl, k_bl, k_fm, k_pos, k_len = jax.random.split(key, 8)
    params = {
        # nn.Embedding(num_features, dim)
        "emb": jax.random.normal(k_emb, (num_features, dim), jnp.float32) * 0.1,
        # Conv1d weight laid out as (W, C_in, C_out) = torch_weight[:, :, w].T
        "wc": jax.random.uniform(k_wc, (W, C, C), jnp.float32, -0.1, 0.1),
        "bc": jax.random.uniform(k_bc, (1, C), jnp.float32, -0.1, 0.1),
        # Linear(cat_dim, hidden_size): (in, out)
        "wl": jax.random.uniform(k_wl, (C, H), jnp.float32, -0.1, 0.1),
        "bl": jax.random.uniform(k_bl, (1, H), jnp.float32, -0.1, 0.1),
    }
    feat_matrix = jax.random.randint(k_fm, (B, L, G), 0, num_features, jnp.int32)
    pos_to_predict = jax.random.randint(k_pos, (B,), 0, L, jnp.int32)
    lengths = jax.random.randint(k_len, (B,), max(1, L - 4), L + 1, jnp.int32)
    source_padding = jnp.arange(L)[None, :] >= lengths[:, None]   # (B, L) bool
    return params, feat_matrix, pos_to_predict, source_padding


if __name__ == "__main__":
    key = jax.random.PRNGKey(0)
    k1, k2 = jax.random.split(key)

    # Config A: H*(W-1) <= W*C  -> fused conv+linear kernel path (single matmul).
    # Config B: H*(W-1) >  W*C  -> unfused two-matmul kernel path.
    configs = [
        dict(key=k1, B=2, L=16, G=4, dim=8, H=32, W=3, num_features=20),
        dict(key=k2, B=2, L=16, G=4, dim=8, H=128, W=3, num_features=20),
    ]

    for cfg in configs:
        params, feat_matrix, pos_to_predict, source_padding = _make_test_case(**cfg)
        prepared = prepare_encoder_params(params)        # one-time weight prep
        h = encoder_forward(feat_matrix, pos_to_predict, source_padding, prepared)
        h = jax.block_until_ready(h)
        h_ref = encoder_reference(feat_matrix, pos_to_predict, source_padding,
                                  params)
        # bf16 activations/weights/output (f32 accumulate) vs f32 reference.
        np.testing.assert_allclose(np.asarray(h.astype(jnp.float32)),
                                   np.asarray(h_ref), rtol=2e-2, atol=2e-2)

    print("KERNEL_OK")
</pallas_src>

<mosaic_0001>
module attributes {stable_mosaic.version = 11 : i64} {
  func.func @_fused_kernel(%arg0: i32, %arg1: i32, %arg2: i32, %arg3: memref<8x128xbf16, #tpu.memory_space<vmem>>, %arg4: memref<128x128xbf16, #tpu.memory_space<vmem>>, %arg5: memref<1x128xf32, #tpu.memory_space<vmem>>, %arg6: memref<8x128xbf16, #tpu.memory_space<vmem>>, %arg7: memref<8x128xf32, #tpu.memory_space<vmem>>) attributes {dimension_semantics = [#tpu.dimension_semantics<parallel>, #tpu.dimension_semantics<parallel>, #tpu.dimension_semantics<arbitrary>], iteration_bounds = array<i64: 1, 1, 1>, scalar_prefetch = 0 : i64, scratch_operands = 1 : i64, tpu.core_type = #tpu.core_type<tc>, window_params = [{transform_indices = @transform_0, window_bounds = array<i64: 8, 128>}, {transform_indices = @transform_1, window_bounds = array<i64: 128, 128>}, {transform_indices = @transform_2, window_bounds = array<i64: 1, 128>}, {transform_indices = @transform_3, window_bounds = array<i64: 8, 128>}]} {
    %c0_i32 = arith.constant 0 : i32
    %0 = arith.cmpi eq, %arg2, %c0_i32 : i32
    %1 = arith.extui %0 : i1 to i32
    %c0_i32_0 = arith.constant 0 : i32
    %2 = arith.cmpi ne, %1, %c0_i32_0 : i32
    scf.if %2 {
      %cst_10 = arith.constant 0.000000e+00 : f32
      %12 = vector.broadcast %cst_10 : f32 to vector<8x128xf32>
      %c0_11 = arith.constant 0 : index
      %c0_12 = arith.constant 0 : index
      %13 = vector.load %arg7[%c0_11, %c0_12] : memref<8x128xf32, #tpu.memory_space<vmem>>, vector<8x128xf32>
      tpu.vector_store %arg7[%c0_11, %c0_12], %12 {strides = array<i32>} : memref<8x128xf32, #tpu.memory_space<vmem>>, vector<8x128xf32>,
    } else {
    }
    %c0 = arith.constant 0 : index
    %c0_1 = arith.constant 0 : index
    %3 = vector.load %arg7[%c0, %c0_1] : memref<8x128xf32, #tpu.memory_space<vmem>>, vector<8x128xf32>
    %c0_2 = arith.constant 0 : index
    %c0_3 = arith.constant 0 : index
    %4 = vector.load %arg3[%c0_2, %c0_3] : memref<8x128xbf16, #tpu.memory_space<vmem>>, vector<8x128xbf16>
    %c0_4 = arith.constant 0 : index
    %c0_5 = arith.constant 0 : index
    %5 = vector.load %arg4[%c0_4, %c0_5] : memref<128x128xbf16, #tpu.memory_space<vmem>>, vector<128x128xbf16>
    %cst = arith.constant dense<0.000000e+00> : vector<8x128xf32>
    %6 = tpu.matmul %4, %5, %cst {dimension_numbers = #tpu.dot_dimension_numbers<[1], [0], [0], [1], [0, 0, 1, 1], [], []>} : vector<8x128xbf16>, vector<128x128xbf16>, vector<8x128xf32> -> vector<8x128xf32>
    %7 = arith.addf %3, %6 : vector<8x128xf32>
    %c0_6 = arith.constant 0 : index
    %c0_7 = arith.constant 0 : index
    %8 = vector.load %arg7[%c0_6, %c0_7] : memref<8x128xf32, #tpu.memory_space<vmem>>, vector<8x128xf32>
    tpu.vector_store %arg7[%c0_6, %c0_7], %7 {strides = array<i32>} : memref<8x128xf32, #tpu.memory_space<vmem>>, vector<8x128xf32>,
    %c0_i32_8 = arith.constant 0 : i32
    %9 = arith.cmpi eq, %arg2, %c0_i32_8 : i32
    %10 = arith.extui %9 : i1 to i32
    %c0_i32_9 = arith.constant 0 : i32
    %11 = arith.cmpi ne, %10, %c0_i32_9 : i32
    scf.if %11 {
      %c0_10 = arith.constant 0 : index
      %c0_11 = arith.constant 0 : index
      %12 = vector.load %arg7[%c0_10, %c0_11] : memref<8x128xf32, #tpu.memory_space<vmem>>, vector<8x128xf32>
      %c0_12 = arith.constant 0 : index
      %c0_13 = arith.constant 0 : index
      %13 = vector.load %arg5[%c0_12, %c0_13] : memref<1x128xf32, #tpu.memory_space<vmem>>, vector<1x128xf32>
      %14 = vector.broadcast %13 : vector<1x128xf32> to vector<8x128xf32>
      %15 = arith.addf %12, %14 : vector<8x128xf32>
      %cst_14 = arith.constant 1.000000e-01 : f32
      %16 = vector.broadcast %cst_14 : f32 to vector<8x128xf32>
      %17 = arith.mulf %16, %15 : vector<8x128xf32>
      %18 = arith.maximumf %15, %17 : vector<8x128xf32>
      %19 = arith.truncf %18 : vector<8x128xf32> to vector<8x128xbf16>
      %c0_15 = arith.constant 0 : index
      %c0_16 = arith.constant 0 : index
      %20 = vector.load %arg6[%c0_15, %c0_16] : memref<8x128xbf16, #tpu.memory_space<vmem>>, vector<8x128xbf16>
      tpu.vector_store %arg6[%c0_15, %c0_16], %19 {strides = array<i32>} : memref<8x128xbf16, #tpu.memory_space<vmem>>, vector<8x128xbf16>,
    } else {
    }
    return
  }
  func.func @transform_0(%arg0: i32, %arg1: i32, %arg2: i32) -> (i32, i32) {
    %c0_i32 = arith.constant 0 : i32
    return %arg1, %arg2 : i32, i32
  }
  func.func @transform_1(%arg0: i32, %arg1: i32, %arg2: i32) -> (i32, i32) {
    %c0_i32 = arith.constant 0 : i32
    return %arg2, %arg0 : i32, i32
  }
  func.func @transform_2(%arg0: i32, %arg1: i32, %arg2: i32) -> (i32, i32) {
    %c0_i32 = arith.constant 0 : i32
    %c0_i32_0 = arith.constant 0 : i32
    return %c0_i32, %arg0 : i32, i32
  }
  func.func @transform_3(%arg0: i32, %arg1: i32, %arg2: i32) -> (i32, i32) {
    %c0_i32 = arith.constant 0 : i32
    return %arg1, %arg0 : i32, i32
  }
}

</mosaic_0001>

<llo_original>
// kernel: tpu_custom_call.1
$region0: #{tpu_custom_call.1}
  #allocation0 [shape = 'u32[]', space=smem, size = 0x4, offset = 0x4, fixed_abs, tag = 'smem constant byte address 0x4 - core index']
  #allocation1 [shape = 'u32[144,128]{1,0:T(1,128)}', space=vmem, size = 0x12000, scoped, tag = 'internal scratch']
  #allocation2 [shape = 'f32[8,128]{1,0:T(8,128)}', space=vmem, size = 0x1000, scoped, tag = 'scratch operand']
  %s0 = inlined_call_operand.hbm [shape: bf16[8,128], index: 0, kind: input, shape index: {}]
  %s1 = inlined_call_operand.hbm [shape: bf16[128,128], index: 1, kind: input, shape index: {}]
  %s2 = inlined_call_operand.vmem [shape: f32[1,128], index: 2, kind: input, shape index: {}]
  %s3 = inlined_call_operand.hbm [shape: bf16[8,128], index: 3, kind: output, shape index: {}]
  %s4 = sld [smem:[#allocation0]]
  $region38: #{tpu_custom_call.1} parent=0
    _
  %s6 = ssub.s32 1, %s4
  %s7 = scalar_select 0, %s6, %s4
  $region1: #{tpu_custom_call.1} parent=0
    #allocation3 [shape = 'u8[2048]{0}', space=vmem, size = 0x800, scoped, tag = 'input window, operand 0, single buffered']
    #allocation4 [shape = 's32[1]{0}', space=sflag, size = 0x4, scoped, tag = 'scoped memory for tpu_custom_call.1']
    #allocation5 [shape = 's32[1]{0}', space=sflag, size = 0x4, scoped, tag = 'scoped memory for tpu_custom_call.1']
    #allocation6 [shape = 'u8[32768]{0}', space=vmem, size = 0x8000, scoped, tag = 'input window, operand 1, single buffered']
    #allocation7 [shape = 's32[1]{0}', space=sflag, size = 0x4, scoped, tag = 'scoped memory for tpu_custom_call.1']
    #allocation8 [shape = 'u8[2048]{0}', space=vmem, size = 0x800, scoped, tag = 'output window, operand 0, single buffered']
    %8 = vsyncpa [#allocation4], 0
    %9 = vsyncpa [#allocation7], 0
    %10 = vsyncpa [#allocation5], 0
    // Predicated region
    $region2: #{tpu_custom_call.1} parent=1 // pred_check
      _
    $region3: #{tpu_custom_call.1} parent=1 // pred_check_branch
      %12 = sbr.rel (0) target = $region5
    $region4: #{tpu_custom_call.1} parent=1 // pred_region
      %s14 = ssub.s32 64, 64
      %15 = vsyncadd [#allocation4], %s14
      %s17 = sshll.u32 [#allocation3], 4
      %s18 = int_to_ptr.vmem [resolvable:$true] %s17
      %20 = dma.hbm_to_vmem [thread:$0]  %s0, 64, %s18, [#allocation4]
    $region5: #{tpu_custom_call.1} parent=1 // pred_fallthru
      _
    // Predicated region
    $region6: #{tpu_custom_call.1} parent=1 // pred_check
      _
    $region7: #{tpu_custom_call.1} parent=1 // pred_check_branch
      %22 = sbr.rel (0) target = $region9
    $region8: #{tpu_custom_call.1} parent=1 // pred_region
      %s24 = ssub.s32 1024, 1024
      %25 = vsyncadd [#allocation7], %s24
      %s26 = sshll.u32 [#allocation6], 4
      %s27 = int_to_ptr.vmem [resolvable:$true] %s26
      %32 = dma.hbm_to_vmem [thread:$0]  %s1, 1024, %s27, [#allocation7], 64, 64, 4
    $region9: #{tpu_custom_call.1} parent=1 // pred_fallthru
      _
    // Predicated region
    $region10: #{tpu_custom_call.1} parent=1 // pred_check
      _
    $region11: #{tpu_custom_call.1} parent=1 // pred_check_branch
      %34 = sbr.rel (0) target = $region13
    $region12: #{tpu_custom_call.1} parent=1 // pred_region
      _
    $region13: #{tpu_custom_call.1} parent=1 // pred_fallthru
      _
    // Predicated region
    $region14: #{tpu_custom_call.1} parent=1 // pred_check
      _
    $region15: #{tpu_custom_call.1} parent=1 // pred_check_branch
      %36 = sbr.rel (0) target = $region17
    $region16: #{tpu_custom_call.1} parent=1 // pred_region
      %37 = dma.done [#allocation4], 64
    $region17: #{tpu_custom_call.1} parent=1 // pred_fallthru
      _
    // Predicated region
    $region18: #{tpu_custom_call.1} parent=1 // pred_check
      _
    $region19: #{tpu_custom_call.1} parent=1 // pred_check_branch
      %39 = sbr.rel (0) target = $region21
    $region20: #{tpu_custom_call.1} parent=1 // pred_region
      %40 = dma.done [#allocation7], 1024
    $region21: #{tpu_custom_call.1} parent=1 // pred_fallthru
      _
    %p42 = scmp.eq.s32.totalorder 0, 0
    // Predicated region
    $region22: #{tpu_custom_call.1} parent=1 // pred_check
      %p43 = pneg %p42
    $region23: #{tpu_custom_call.1} parent=1 // pred_check_branch
      %45 = sbr.rel (%p43) target = $region25
    $region24: #{tpu_custom_call.1} parent=1 // pred_region
      %46 = vst [vmem:[#allocation2] sm:$0xff] 0.0
    $region25: #{tpu_custom_call.1} parent=1 // pred_fallthru
      _
    %v47 = vld [vmem:[#allocation2] sm:$0xff]
    %v48 = vld [vmem:[#allocation3] sm:$0xf]
    %v49 = vld [vmem:[#allocation6] sm:$0xf]
    %v50 = vld [vmem:[#allocation6 + $0x4] sm:$0xf]
    %v51 = vld [vmem:[#allocation6 + $0x8] sm:$0xf]
    %v52 = vld [vmem:[#allocation6 + $0xc] sm:$0xf]
    %v53 = vld [vmem:[#allocation6 + $0x10] sm:$0xf]
    %v54 = vld [vmem:[#allocation6 + $0x14] sm:$0xf]
    %v55 = vld [vmem:[#allocation6 + $0x18] sm:$0xf]
    %v56 = vld [vmem:[#allocation6 + $0x1c] sm:$0xf]
    %v57 = vld [vmem:[#allocation6 + $0x20] sm:$0xf]
    %v58 = vld [vmem:[#allocation6 + $0x24] sm:$0xf]
    %v59 = vld [vmem:[#allocation6 + $0x28] sm:$0xf]
    %v60 = vld [vmem:[#allocation6 + $0x2c] sm:$0xf]
    %v61 = vld [vmem:[#allocation6 + $0x30] sm:$0xf]
    %v62 = vld [vmem:[#allocation6 + $0x34] sm:$0xf]
    %v63 = vld [vmem:[#allocation6 + $0x38] sm:$0xf]
    %v64 = vld [vmem:[#allocation6 + $0x3c] sm:$0xf]
    %v81 = vunpack.c.l.b16 %v49
    %v82 = vunpack.c.l.b16 %v50
    %v83 = vunpack.c.l.b16 %v51
    %v84 = vunpack.c.l.b16 %v52
    %v85 = vunpack.c.l.b16 %v53
    %v86 = vunpack.c.l.b16 %v54
    %v87 = vunpack.c.l.b16 %v55
    %v88 = vunpack.c.l.b16 %v56
    %v89 = vunpack.c.l.b16 %v57
    %v90 = vunpack.c.l.b16 %v58
    %v91 = vunpack.c.l.b16 %v59
    %v92 = vunpack.c.l.b16 %v60
    %v93 = vunpack.c.l.b16 %v61
    %v94 = vunpack.c.l.b16 %v62
    %v95 = vunpack.c.l.b16 %v63
    %v96 = vunpack.c.l.b16 %v64
    %v97 = vpack.c.b16 %v82, %v81
    %v98 = vpack.c.b16 %v84, %v83
    %v99 = vpack.c.b16 %v86, %v85
    %v100 = vpack.c.b16 %v88, %v87
    %v101 = vpack.c.b16 %v90, %v89
    %v102 = vpack.c.b16 %v92, %v91
    %v103 = vpack.c.b16 %v94, %v93
    %v104 = vpack.c.b16 %v96, %v95
    %113 = vmatprep.subr.bf16.mxu0 0
    %114 = vmatpush1.bf16.msra.mxu0 %v104
    %115 = vmatprep.subr.bf16.mxu0 0
    %116 = vmatpush1.bf16.msra.mxu0 %v103
    %117 = vmatprep.subr.bf16.mxu0 0
    %118 = vmatpush1.bf16.msra.mxu0 %v102
    %119 = vmatprep.subr.bf16.mxu0 0
    %120 = vmatpush1.bf16.msra.mxu0 %v101
    %121 = vmatprep.subr.bf16.mxu0 0
    %122 = vmatpush1.bf16.msra.mxu0 %v100
    %123 = vmatprep.subr.bf16.mxu0 0
    %124 = vmatpush1.bf16.msra.mxu0 %v99
    %125 = vmatprep.subr.bf16.mxu0 0
    %126 = vmatpush1.bf16.msra.mxu0 %v98
    %127 = vmatprep.subr.bf16.mxu0 0
    %128 = vmatpush1.bf16.msra.mxu0 %v97
    %129 = vmatprep.subr.bf16.mxu0 0
    %130 = vmatpush2.bf16.msra.mxu0 0
    %131 = vmatprep.subr.bf16.mxu0 0
    %132 = vmatpush2.bf16.msra.mxu0 0
    %133 = vmatprep.subr.bf16.mxu0 0
    %134 = vmatpush2.bf16.msra.mxu0 0
    %135 = vmatprep.subr.bf16.mxu0 0
    %136 = vmatpush2.bf16.msra.mxu0 0
    %137 = vmatprep.subr.bf16.mxu0 0
    %138 = vmatpush2.bf16.msra.mxu0 0
    %139 = vmatprep.subr.bf16.mxu0 0
    %140 = vmatpush2.bf16.msra.mxu0 0
    %141 = vmatprep.subr.bf16.mxu0 0
    %142 = vmatpush2.bf16.msra.mxu0 0
    %143 = vmatprep.subr.bf16.mxu0 0
    %144 = vmatpush2.bf16.msra.mxu0 0
    %145 = vmatprep.mubr.bf16.mxu0 0
    %146 = vmatmul.mubr.bf16.gmra.mxu0 %v48
    %v147 = vpop.f32.mrf.mxu0
    %v148 = vadd.f32 0.0, %v147
    %v149 = vpop.f32.mrf.mxu0
    %v150 = vpop.f32.mrf.mxu0
    %v151 = vpop.f32.mrf.mxu0
    %152 = vdwg.mxu0
    %v153 = vadd.f32 %v47, %v148
    %154 = vst [vmem:[#allocation2] sm:$0xff] %v153
    // Predicated region
    $region26: #{tpu_custom_call.1} parent=1 // pred_check
      %p155 = pneg %p42
    $region27: #{tpu_custom_call.1} parent=1 // pred_check_branch
      %157 = sbr.rel (%p155) target = $region29
    $region28: #{tpu_custom_call.1} parent=1 // pred_region
      %v158 = vld [vmem:[#allocation2] sm:$0xff]
      %v159 = vld [vmem:[%s2] sm:$0x1]
      %v161 = vlaneseq
      %v162 = vshrl.u32 %v161, 7
      %v163 = vsub.s32 0, %v162
      %v164 = vrot.slane %v159, %v163
      %v166 = vadd.f32 %v158, %v164
      %v167 = vmul.f32 %v166, 0.1
      %v168 = vmax.f32 %v166, %v167
      %v169 = vpack.c.bf16 %v168, %v168
      %170 = vst [vmem:[#allocation8] sm:$0xf] %v169
    $region29: #{tpu_custom_call.1} parent=1 // pred_fallthru
      _
    // Predicated region
    $region30: #{tpu_custom_call.1} parent=1 // pred_check
      _
    $region31: #{tpu_custom_call.1} parent=1 // pred_check_branch
      %172 = sbr.rel (0) target = $region33
    $region32: #{tpu_custom_call.1} parent=1 // pred_region
      %s174 = ssub.s32 64, 64
      %175 = vsyncadd [#allocation5], %s174
      %s177 = sshll.u32 [#allocation8], 4
      %s178 = int_to_ptr.vmem [resolvable:$true] %s177
      %180 = dma.vmem_to_hbm [thread:$0]  %s178, 64, %s3, [#allocation5]
    $region33: #{tpu_custom_call.1} parent=1 // pred_fallthru
      _
    // Predicated region
    $region34: #{tpu_custom_call.1} parent=1 // pred_check
      _
    $region35: #{tpu_custom_call.1} parent=1 // pred_check_branch
      %182 = sbr.rel (0) target = $region37
    $region36: #{tpu_custom_call.1} parent=1 // pred_region
      %183 = dma.done [#allocation5], 64
    $region37: #{tpu_custom_call.1} parent=1 // pred_fallthru
      _
    %184 = vsyncpa [#allocation4], 1
    %185 = vsyncpa [#allocation7], 1
    %186 = vsyncpa [#allocation5], 1

</llo_original>
